<compile_context>
chip_gen: v5e
topology: v5e:2x2
jax: 0.10.0
libtpu: 0.0.40
codegen_flags: <defaults>
</compile_context>

<pallas_src>
import math
import functools

import jax
import jax.numpy as jnp
from jax.experimental import pallas as pl
from jax.experimental.pallas import tpu as pltpu

HIDDEN_LAYER = 70      # logical hidden width (matches the torch module)
H_PAD = 128            # lane-dense padded hidden width
STATE_DIM = 8          # len(TradingEnv().reset()) -- small synthetic choice
BLOCK_B = 512          # batch tile (lane axis -> multiple of 128; 256/512
                       # fills full 256-wide MXU passes on v6e/v7x)


def _round_up(x, m):
    return (x + m - 1) // m * m


def _mlp_kernel(x_ref, w1_ref, b1_ref, w2_ref, b2_ref, w3_ref, b3_ref, o_ref):
    # One batch tile (on the lane axis) per grid step; all weights/biases are
    # VMEM-resident across steps.  Everything stays f32.
    x = x_ref[...]                                           # (S, TB)

    # Layer 1: (H_PAD, S) @ (S, TB) -> (H_PAD, TB); bias broadcast over lanes.
    h1 = jnp.dot(w1_ref[...], x,
                 preferred_element_type=jnp.float32) + b1_ref[...]
    h1 = jnp.maximum(h1, 0.0)

    # Layer 2: (H_PAD, H_PAD) @ (H_PAD, TB) -> (H_PAD, TB).
    h2 = jnp.dot(w2_ref[...], h1,
                 preferred_element_type=jnp.float32) + b2_ref[...]
    h2 = jnp.maximum(h2, 0.0)

    # Layer 3: (1, H_PAD) @ (H_PAD, TB) -> lane-dense (1, TB) row.
    # b3 is a scalar read from SMEM (no VMEM tile / DMA for it).
    y = jnp.dot(w3_ref[...], h2,
                preferred_element_type=jnp.float32) + b3_ref[0]

    o_ref[...] = jnp.clip(y, -1.0, 1.0)


@functools.partial(jax.jit, static_argnames=("block_b",))
def deterministic_policy_forward(x, packed_params, *, block_b=BLOCK_B):
    """x: [B, STATE_DIM] f32 -> [B, 1] f32 in [-1, 1]."""
    w1, b1, w2, b2, w3, b3 = packed_params
    B, S = x.shape

    # Batch lives on the lane axis -> tile must be a multiple of 128.
    # With block_b=512 large rollout batches run in a few (often even) steps,
    # which v7x shards across its two TensorCores via "parallel".
    tb = min(block_b, _round_up(B, 128))
    b_pad = _round_up(B, tb)
    # Layout plumbing only (pad + transpose of a Bx8 array is negligible).
    xt = jnp.pad(x, ((0, b_pad - B), (0, 0))).T              # (S, b_pad)

    grid = (b_pad // tb,)

    def resident(shape):
        # Same block every grid step -> loaded once, stays VMEM-resident.
        return pl.BlockSpec(shape, lambda i: (0, 0))

    out = pl.pallas_call(
        _mlp_kernel,
        out_shape=jax.ShapeDtypeStruct((1, b_pad), jnp.float32),
        grid_spec=pl.GridSpec(
            grid=grid,
            in_specs=[
                pl.BlockSpec((S, tb), lambda i: (0, i)),      # x^T, batch on lanes
                resident((H_PAD, S)),                         # w1 (out, in)
                resident((H_PAD, 1)),                         # b1 column
                resident((H_PAD, H_PAD)),                     # w2 (out, in)
                resident((H_PAD, 1)),                         # b2 column
                resident((1, H_PAD)),                         # w3 row
                pl.BlockSpec(memory_space=pltpu.MemorySpace.SMEM),  # b3 scalar
            ],
            out_specs=pl.BlockSpec((1, tb), lambda i: (0, i)),  # lane-dense row
        ),
        compiler_params=pltpu.CompilerParams(
            dimension_semantics=("parallel",)),
    )(xt, w1, b1, w2, b2, w3, b3)

    # Back to the module's (B, 1) output shape (wrapper-side layout plumbing).
    return out[0, :B].reshape(B, 1)


def init_params(key):
    """torch.nn.Linear-style init (uniform +/- 1/sqrt(fan_in)), unpadded f32.

    Raw weights are (in_features, out_features) so the reference is x @ W + b.
    """
    def linear(k, fan_in, fan_out):
        kw, kb = jax.random.split(k)
        bound = 1.0 / math.sqrt(fan_in)
        w = jax.random.uniform(kw, (fan_in, fan_out), jnp.float32, -bound, bound)
        b = jax.random.uniform(kb, (fan_out,), jnp.float32, -bound, bound)
        return w, b

    k1, k2, k3 = jax.random.split(key, 3)
    w1, b1 = linear(k1, STATE_DIM, HIDDEN_LAYER)
    w2, b2 = linear(k2, HIDDEN_LAYER, HIDDEN_LAYER)
    w3, b3 = linear(k3, HIDDEN_LAYER, 1)
    return w1, b1, w2, b2, w3, b3


def pack_params(raw):
    """Feature-major packing: (out, in) weights, hidden dim padded 70 -> 128.

    All params stay f32 (torch fidelity; the kernel is not compute-bound).
    Padded rows/cols are zero, so padded hidden features stay exactly 0 after
    ReLU and never contribute to the output.
    """
    w1, b1, w2, b2, w3, b3 = raw
    ph = H_PAD - HIDDEN_LAYER
    w1p = jnp.pad(w1.T, ((0, ph), (0, 0)))                  # (H_PAD, S)
    b1p = jnp.pad(b1, (0, ph)).reshape(H_PAD, 1)            # (H_PAD, 1)
    w2p = jnp.pad(w2.T, ((0, ph), (0, ph)))                 # (H_PAD, H_PAD)
    b2p = jnp.pad(b2, (0, ph)).reshape(H_PAD, 1)            # (H_PAD, 1)
    w3p = jnp.pad(w3.T, ((0, 0), (0, ph)))                  # (1, H_PAD)
    b3p = b3.reshape(1).astype(jnp.float32)                 # (1,) scalar -> SMEM
    return w1p, b1p, w2p, b2p, w3p, b3p


def reference_forward(x, raw):
    """Original module math in plain f32 (x @ W + b form)."""
    w1, b1, w2, b2, w3, b3 = raw
    h1 = jnp.maximum(x @ w1 + b1, 0.0)
    h2 = jnp.maximum(h1 @ w2 + b2, 0.0)
    return jnp.clip(h2 @ w3 + b3, -1.0, 1.0)


if __name__ == "__main__":
    key = jax.random.PRNGKey(0)
    kx, kp = jax.random.split(key)

    raw_params = init_params(kp)
    params = pack_params(raw_params)

    # Rollout-sized batch (amortizes launch overhead + weight DMA) ...
    x = jax.random.normal(kx, (256, STATE_DIM), jnp.float32)
    # ... and the module-like tiny batch (exercises the batch-padding path).
    x_small = x[:2]

    # TODO(synk): the torch NaN assert is a host-side check here, not in-kernel.
    assert not bool(jnp.isnan(x).any()), "NaN in input"

    out = jax.block_until_ready(deterministic_policy_forward(x, params))
    out_small = jax.block_until_ready(deterministic_policy_forward(x_small, params))

    ref = reference_forward(x, raw_params)

    assert out.shape == (256, 1) and out_small.shape == (2, 1)
    # Tolerance covers MXU f32-pass accumulation-order / precision-mode
    # differences vs. XLA's matmul; a layout bug would be orders larger.
    assert jnp.allclose(out, ref, atol=2e-2, rtol=1e-2), \
        float(jnp.abs(out - ref).max())
    assert jnp.allclose(out_small, out[:2], atol=1e-5)
    assert bool(jnp.all(out >= -1.0)) and bool(jnp.all(out <= 1.0))

    print("KERNEL_OK")
</pallas_src>

<mosaic_0001>
module attributes {stable_mosaic.version = 11 : i64} {
  func.func @_mlp_kernel(%arg0: i32, %arg1: memref<8x256xf32, #tpu.memory_space<vmem>>, %arg2: memref<128x8xf32, #tpu.memory_space<vmem>>, %arg3: memref<128x1xf32, #tpu.memory_space<vmem>>, %arg4: memref<128x128xf32, #tpu.memory_space<vmem>>, %arg5: memref<128x1xf32, #tpu.memory_space<vmem>>, %arg6: memref<1x128xf32, #tpu.memory_space<vmem>>, %arg7: memref<1xf32, #tpu.memory_space<smem>>, %arg8: memref<1x256xf32, #tpu.memory_space<vmem>>) attributes {dimension_semantics = [#tpu.dimension_semantics<parallel>], iteration_bounds = array<i64: 1>, scalar_prefetch = 0 : i64, scratch_operands = 0 : i64, tpu.core_type = #tpu.core_type<tc>, window_params = [{transform_indices = @transform_0, window_bounds = array<i64: 8, 256>}, {pipeline_mode = #tpu.pipeline_mode<synchronous>, transform_indices = @transform_1, window_bounds = array<i64: 128, 8>}, {pipeline_mode = #tpu.pipeline_mode<synchronous>, transform_indices = @transform_2, window_bounds = array<i64: 128, 1>}, {pipeline_mode = #tpu.pipeline_mode<synchronous>, transform_indices = @transform_3, window_bounds = array<i64: 128, 128>}, {pipeline_mode = #tpu.pipeline_mode<synchronous>, transform_indices = @transform_4, window_bounds = array<i64: 128, 1>}, {pipeline_mode = #tpu.pipeline_mode<synchronous>, transform_indices = @transform_5, window_bounds = array<i64: 1, 128>}, {transform_indices = @transform_6, window_bounds = array<i64: 1>}, {transform_indices = @transform_7, window_bounds = array<i64: 1, 256>}]} {
    %c0 = arith.constant 0 : index
    %c0_0 = arith.constant 0 : index
    %0 = vector.load %arg1[%c0, %c0_0] : memref<8x256xf32, #tpu.memory_space<vmem>>, vector<8x256xf32>
    %c0_1 = arith.constant 0 : index
    %c0_2 = arith.constant 0 : index
    %1 = vector.load %arg2[%c0_1, %c0_2] : memref<128x8xf32, #tpu.memory_space<vmem>>, vector<128x8xf32>
    %cst = arith.constant dense<0.000000e+00> : vector<128x256xf32>
    %2 = tpu.matmul %1, %0, %cst {dimension_numbers = #tpu.dot_dimension_numbers<[1], [0], [0], [1], [0, 0, 1, 1], [], []>} : vector<128x8xf32>, vector<8x256xf32>, vector<128x256xf32> -> vector<128x256xf32>
    %c0_3 = arith.constant 0 : index
    %c0_4 = arith.constant 0 : index
    %3 = vector.load %arg3[%c0_3, %c0_4] : memref<128x1xf32, #tpu.memory_space<vmem>>, vector<128x1xf32>
    %4 = vector.broadcast %3 : vector<128x1xf32> to vector<128x256xf32>
    %5 = arith.addf %2, %4 : vector<128x256xf32>
    %cst_5 = arith.constant 0.000000e+00 : f32
    %6 = vector.broadcast %cst_5 : f32 to vector<128x256xf32>
    %7 = arith.maximumf %5, %6 : vector<128x256xf32>
    %c0_6 = arith.constant 0 : index
    %c0_7 = arith.constant 0 : index
    %8 = vector.load %arg4[%c0_6, %c0_7] : memref<128x128xf32, #tpu.memory_space<vmem>>, vector<128x128xf32>
    %cst_8 = arith.constant dense<0.000000e+00> : vector<128x256xf32>
    %9 = tpu.matmul %8, %7, %cst_8 {dimension_numbers = #tpu.dot_dimension_numbers<[1], [0], [0], [1], [0, 0, 1, 1], [], []>} : vector<128x128xf32>, vector<128x256xf32>, vector<128x256xf32> -> vector<128x256xf32>
    %c0_9 = arith.constant 0 : index
    %c0_10 = arith.constant 0 : index
    %10 = vector.load %arg5[%c0_9, %c0_10] : memref<128x1xf32, #tpu.memory_space<vmem>>, vector<128x1xf32>
    %11 = vector.broadcast %10 : vector<128x1xf32> to vector<128x256xf32>
    %12 = arith.addf %9, %11 : vector<128x256xf32>
    %cst_11 = arith.constant 0.000000e+00 : f32
    %13 = vector.broadcast %cst_11 : f32 to vector<128x256xf32>
    %14 = arith.maximumf %12, %13 : vector<128x256xf32>
    %c0_12 = arith.constant 0 : index
    %c0_13 = arith.constant 0 : index
    %15 = vector.load %arg6[%c0_12, %c0_13] : memref<1x128xf32, #tpu.memory_space<vmem>>, vector<1x128xf32>
    %cst_14 = arith.constant dense<0.000000e+00> : vector<1x256xf32>
    %16 = tpu.matmul %15, %14, %cst_14 {dimension_numbers = #tpu.dot_dimension_numbers<[1], [0], [0], [1], [0, 0, 1, 1], [], []>} : vector<1x128xf32>, vector<128x256xf32>, vector<1x256xf32> -> vector<1x256xf32>
    %c0_15 = arith.constant 0 : index
    %17 = memref.load %arg7[%c0_15] : memref<1xf32, #tpu.memory_space<smem>>
    %18 = vector.broadcast %17 : f32 to vector<1x256xf32>
    %19 = arith.addf %16, %18 : vector<1x256xf32>
    %cst_16 = arith.constant -1.000000e+00 : f32
    %cst_17 = arith.constant 1.000000e+00 : f32
    %20 = vector.broadcast %cst_16 : f32 to vector<1x256xf32>
    %21 = arith.maximumf %20, %19 : vector<1x256xf32>
    %22 = vector.broadcast %cst_17 : f32 to vector<1x256xf32>
    %23 = arith.minimumf %22, %21 : vector<1x256xf32>
    %c0_18 = arith.constant 0 : index
    %c0_19 = arith.constant 0 : index
    %24 = vector.load %arg8[%c0_18, %c0_19] : memref<1x256xf32, #tpu.memory_space<vmem>>, vector<1x256xf32>
    tpu.vector_store %arg8[%c0_18, %c0_19], %23 {strides = array<i32>} : memref<1x256xf32, #tpu.memory_space<vmem>>, vector<1x256xf32>,
    return
  }
  func.func @transform_0(%arg0: i32) -> (i32, i32) {
    %c0_i32 = arith.constant 0 : i32
    %c0_i32_0 = arith.constant 0 : i32
    return %c0_i32, %arg0 : i32, i32
  }
  func.func @transform_1(%arg0: i32) -> (i32, i32) {
    %c0_i32 = arith.constant 0 : i32
    %c0_i32_0 = arith.constant 0 : i32
    %c0_i32_1 = arith.constant 0 : i32
    return %c0_i32, %c0_i32_0 : i32, i32
  }
  func.func @transform_2(%arg0: i32) -> (i32, i32) {
    %c0_i32 = arith.constant 0 : i32
    %c0_i32_0 = arith.constant 0 : i32
    %c0_i32_1 = arith.constant 0 : i32
    return %c0_i32, %c0_i32_0 : i32, i32
  }
  func.func @transform_3(%arg0: i32) -> (i32, i32) {
    %c0_i32 = arith.constant 0 : i32
    %c0_i32_0 = arith.constant 0 : i32
    %c0_i32_1 = arith.constant 0 : i32
    return %c0_i32, %c0_i32_0 : i32, i32
  }
  func.func @transform_4(%arg0: i32) -> (i32, i32) {
    %c0_i32 = arith.constant 0 : i32
    %c0_i32_0 = arith.constant 0 : i32
    %c0_i32_1 = arith.constant 0 : i32
    return %c0_i32, %c0_i32_0 : i32, i32
  }
  func.func @transform_5(%arg0: i32) -> (i32, i32) {
    %c0_i32 = arith.constant 0 : i32
    %c0_i32_0 = arith.constant 0 : i32
    %c0_i32_1 = arith.constant 0 : i32
    return %c0_i32, %c0_i32_0 : i32, i32
  }
  func.func @transform_6(%arg0: i32) -> i32 {
    %c0_i32 = arith.constant 0 : i32
    %c0_i32_0 = arith.constant 0 : i32
    return %c0_i32 : i32
  }
  func.func @transform_7(%arg0: i32) -> (i32, i32) {
    %c0_i32 = arith.constant 0 : i32
    %c0_i32_0 = arith.constant 0 : i32
    return %c0_i32, %arg0 : i32, i32
  }
}

</mosaic_0001>

<llo_original>
// kernel: deterministic_policy_forward.1
$region0: #{deterministic_policy_forward.1}
  #allocation0 [shape = 'u32[]', space=smem, size = 0x4, offset = 0x4, fixed_abs, tag = 'smem constant byte address 0x4 - core index']
  #allocation1 [shape = 'u32[72,128]{1,0:T(1,128)}', space=vmem, size = 0x9000, scoped, tag = 'internal scratch']
  #allocation2 [shape = 'f32[1]{0:T(128)S(6)}', space=smem, size = 0x200, scoped, tag = 'scoped memory for deterministic_policy_forward.1']
  %s0 = inlined_call_operand.vmem [shape: f32[8,256], index: 0, kind: input, shape index: {}]
  %s1 = inlined_call_operand.vmem [shape: f32[128,8], index: 1, kind: input, shape index: {}]
  %s2 = inlined_call_operand.vmem [shape: f32[128,1], index: 2, kind: input, shape index: {}]
  %s3 = inlined_call_operand.vmem [shape: f32[128,128], index: 3, kind: input, shape index: {}]
  %s4 = inlined_call_operand.vmem [shape: f32[128,1], index: 4, kind: input, shape index: {}]
  %s5 = inlined_call_operand.vmem [shape: f32[1,128], index: 5, kind: input, shape index: {}]
  %s6 = inlined_call_operand.<no memory space> [shape: f32[1], index: 6, kind: input, shape index: {}]
  %s7 = inlined_call_operand.hbm [shape: f32[1,256], index: 7, kind: output, shape index: {}]
  %s8 = sld [smem:[#allocation0]]
  $region38: #{deterministic_policy_forward.1} parent=0
    _
  %s10 = ssub.s32 1, %s8
  %s11 = scalar_select 0, %s10, %s8
  %12 = sst [smem:[#allocation2]] %s6
  $region1: #{deterministic_policy_forward.1} parent=0
    #allocation3 [shape = 'u8[1024]{0}', space=vmem, size = 0x400, scoped, tag = 'output window, operand 0, single buffered']
    #allocation4 [shape = 's32[1]{0}', space=sflag, size = 0x4, scoped, tag = 'scoped memory for deterministic_policy_forward.1']
    %13 = vsyncpa [#allocation4], 0
    // Predicated region
    $region2: #{deterministic_policy_forward.1} parent=1 // pred_check
      _
    $region3: #{deterministic_policy_forward.1} parent=1 // pred_check_branch
      %15 = sbr.rel (0) target = $region5
    $region4: #{deterministic_policy_forward.1} parent=1 // pred_region
      _
    $region5: #{deterministic_policy_forward.1} parent=1 // pred_fallthru
      _
    // Predicated region
    $region6: #{deterministic_policy_forward.1} parent=1 // pred_check
      _
    $region7: #{deterministic_policy_forward.1} parent=1 // pred_check_branch
      %17 = sbr.rel (0) target = $region9
    $region8: #{deterministic_policy_forward.1} parent=1 // pred_region
      _
    $region9: #{deterministic_policy_forward.1} parent=1 // pred_fallthru
      _
    // Predicated region
    $region10: #{deterministic_policy_forward.1} parent=1 // pred_check
      _
    $region11: #{deterministic_policy_forward.1} parent=1 // pred_check_branch
      %19 = sbr.rel (0) target = $region13
    $region12: #{deterministic_policy_forward.1} parent=1 // pred_region
      _
    $region13: #{deterministic_policy_forward.1} parent=1 // pred_fallthru
      _
    // Predicated region
    $region14: #{deterministic_policy_forward.1} parent=1 // pred_check
      _
    $region15: #{deterministic_policy_forward.1} parent=1 // pred_check_branch
      %21 = sbr.rel (0) target = $region17
    $region16: #{deterministic_policy_forward.1} parent=1 // pred_region
      _
    $region17: #{deterministic_policy_forward.1} parent=1 // pred_fallthru
      _
    // Predicated region
    $region18: #{deterministic_policy_forward.1} parent=1 // pred_check
      _
    $region19: #{deterministic_policy_forward.1} parent=1 // pred_check_branch
      %23 = sbr.rel (0) target = $region21
    $region20: #{deterministic_policy_forward.1} parent=1 // pred_region
      _
    $region21: #{deterministic_policy_forward.1} parent=1 // pred_fallthru
      _
    // Predicated region
    $region22: #{deterministic_policy_forward.1} parent=1 // pred_check
      _
    $region23: #{deterministic_policy_forward.1} parent=1 // pred_check_branch
      %25 = sbr.rel (0) target = $region25
    $region24: #{deterministic_policy_forward.1} parent=1 // pred_region
      _
    $region25: #{deterministic_policy_forward.1} parent=1 // pred_fallthru
      _
    // Predicated region
    $region26: #{deterministic_policy_forward.1} parent=1 // pred_check
      _
    $region27: #{deterministic_policy_forward.1} parent=1 // pred_check_branch
      %27 = sbr.rel (0) target = $region29
    $region28: #{deterministic_policy_forward.1} parent=1 // pred_region
      _
    $region29: #{deterministic_policy_forward.1} parent=1 // pred_fallthru
      _
    %v28 = vld [vmem:[%s0] sm:$0xff]
    %v29 = vld [vmem:[%s0 + $0x8] sm:$0xff]
    %v30 = vld [vmem:[%s1] sm:$0xff]
    %v31 = vld [vmem:[%s1 + $0x8] sm:$0xff]
    %v32 = vld [vmem:[%s1 + $0x10] sm:$0xff]
    %v33 = vld [vmem:[%s1 + $0x18] sm:$0xff]
    %v34 = vld [vmem:[%s1 + $0x20] sm:$0xff]
    %v35 = vld [vmem:[%s1 + $0x28] sm:$0xff]
    %v36 = vld [vmem:[%s1 + $0x30] sm:$0xff]
    %v37 = vld [vmem:[%s1 + $0x38] sm:$0xff]
    %v38 = vld [vmem:[%s1 + $0x40] sm:$0xff]
    %v39 = vld [vmem:[%s1 + $0x48] sm:$0xff]
    %v40 = vld [vmem:[%s1 + $0x50] sm:$0xff]
    %v41 = vld [vmem:[%s1 + $0x58] sm:$0xff]
    %v42 = vld [vmem:[%s1 + $0x60] sm:$0xff]
    %v43 = vld [vmem:[%s1 + $0x68] sm:$0xff]
    %v44 = vld [vmem:[%s1 + $0x70] sm:$0xff]
    %v45 = vld [vmem:[%s1 + $0x78] sm:$0xff]
    %v46 = vld [vmem:[%s2] sm:$0xff]
    %v47 = vld [vmem:[%s2 + $0x8] sm:$0xff]
    %v48 = vld [vmem:[%s2 + $0x10] sm:$0xff]
    %v49 = vld [vmem:[%s2 + $0x18] sm:$0xff]
    %v50 = vld [vmem:[%s2 + $0x20] sm:$0xff]
    %v51 = vld [vmem:[%s2 + $0x28] sm:$0xff]
    %v52 = vld [vmem:[%s2 + $0x30] sm:$0xff]
    %v53 = vld [vmem:[%s2 + $0x38] sm:$0xff]
    %v54 = vld [vmem:[%s2 + $0x40] sm:$0xff]
    %v55 = vld [vmem:[%s2 + $0x48] sm:$0xff]
    %v56 = vld [vmem:[%s2 + $0x50] sm:$0xff]
    %v57 = vld [vmem:[%s2 + $0x58] sm:$0xff]
    %v58 = vld [vmem:[%s2 + $0x60] sm:$0xff]
    %v59 = vld [vmem:[%s2 + $0x68] sm:$0xff]
    %v60 = vld [vmem:[%s2 + $0x70] sm:$0xff]
    %v61 = vld [vmem:[%s2 + $0x78] sm:$0xff]
    %63 = vset.pattern.permute.xlu0 0
    %64 = vperm.xlu0 %63, %v46
    %v65 = vpop.permute.xlu0 %64
    %68 = vset.pattern.permute.xlu0 0
    %69 = vperm.xlu0 %68, %v47
    %v70 = vpop.permute.xlu0 %69
    %73 = vset.pattern.permute.xlu0 0
    %74 = vperm.xlu0 %73, %v48
    %v75 = vpop.permute.xlu0 %74
    %78 = vset.pattern.permute.xlu0 0
    %79 = vperm.xlu0 %78, %v49
    %v80 = vpop.permute.xlu0 %79
    %83 = vset.pattern.permute.xlu0 0
    %84 = vperm.xlu0 %83, %v50
    %v85 = vpop.permute.xlu0 %84
    %88 = vset.pattern.permute.xlu0 0
    %89 = vperm.xlu0 %88, %v51
    %v90 = vpop.permute.xlu0 %89
    %93 = vset.pattern.permute.xlu0 0
    %94 = vperm.xlu0 %93, %v52
    %v95 = vpop.permute.xlu0 %94
    %98 = vset.pattern.permute.xlu0 0
    %99 = vperm.xlu0 %98, %v53
    %v100 = vpop.permute.xlu0 %99
    %103 = vset.pattern.permute.xlu0 0
    %104 = vperm.xlu0 %103, %v54
    %v105 = vpop.permute.xlu0 %104
    %108 = vset.pattern.permute.xlu0 0
    %109 = vperm.xlu0 %108, %v55
    %v110 = vpop.permute.xlu0 %109
    %113 = vset.pattern.permute.xlu0 0
    %114 = vperm.xlu0 %113, %v56
    %v115 = vpop.permute.xlu0 %114
    %118 = vset.pattern.permute.xlu0 0
    %119 = vperm.xlu0 %118, %v57
    %v120 = vpop.permute.xlu0 %119
    %123 = vset.pattern.permute.xlu0 0
    %124 = vperm.xlu0 %123, %v58
    %v125 = vpop.permute.xlu0 %124
    %128 = vset.pattern.permute.xlu0 0
    %129 = vperm.xlu0 %128, %v59
    %v130 = vpop.permute.xlu0 %129
    %133 = vset.pattern.permute.xlu0 0
    %134 = vperm.xlu0 %133, %v60
    %v135 = vpop.permute.xlu0 %134
    %138 = vset.pattern.permute.xlu0 0
    %139 = vperm.xlu0 %138, %v61
    %v140 = vpop.permute.xlu0 %139
    %vm142 = vcmask 64512
    %v144 = vsel %vm142, %v30, 0
    %v147 = vsel %vm142, %v31, 0
    %v150 = vsel %vm142, %v32, 0
    %v153 = vsel %vm142, %v33, 0
    %v156 = vsel %vm142, %v34, 0
    %v159 = vsel %vm142, %v35, 0
    %v162 = vsel %vm142, %v36, 0
    %v165 = vsel %vm142, %v37, 0
    %v168 = vsel %vm142, %v38, 0
    %v171 = vsel %vm142, %v39, 0
    %v174 = vsel %vm142, %v40, 0
    %v177 = vsel %vm142, %v41, 0
    %v180 = vsel %vm142, %v42, 0
    %v183 = vsel %vm142, %v43, 0
    %v186 = vsel %vm142, %v44, 0
    %v189 = vsel %vm142, %v45, 0
    %191 = vmatpush.msra.mxu0 0.0
    %192 = vmatpush.msra.mxu0 0.0
    %193 = vmatpush.msra.mxu0 0.0
    %194 = vmatpush.msra.mxu0 0.0
    %195 = vmatpush.msra.mxu0 0.0
    %196 = vmatpush.msra.mxu0 0.0
    %197 = vmatpush.msra.mxu0 0.0
    %198 = vmatpush.msra.mxu0 0.0
    %199 = vmatpush.msra.mxu0 0.0
    %200 = vmatpush.msra.mxu0 0.0
    %201 = vmatpush.msra.mxu0 0.0
    %202 = vmatpush.msra.mxu0 0.0
    %203 = vmatpush.msra.mxu0 0.0
    %204 = vmatpush.msra.mxu0 0.0
    %205 = vmatpush.msra.mxu0 0.0
    %206 = vmatpush.msra.mxu0 %v28
    %207 = vmatmul.f32.gmra.mxu0 %v144
    %v208 = vpop.f32.mrf.mxu0
    %v209 = vadd.f32 %v65, %v208
    %210 = vmatmul.f32.gmra.mxu0 %v147
    %v211 = vpop.f32.mrf.mxu0
    %v212 = vadd.f32 %v70, %v211
    %213 = vmatmul.f32.gmra.mxu0 %v150
    %v214 = vpop.f32.mrf.mxu0
    %v215 = vadd.f32 %v75, %v214
    %216 = vmatmul.f32.gmra.mxu0 %v153
    %v217 = vpop.f32.mrf.mxu0
    %v218 = vadd.f32 %v80, %v217
    %219 = vmatmul.f32.gmra.mxu0 %v156
    %v220 = vpop.f32.mrf.mxu0
    %v221 = vadd.f32 %v85, %v220
    %222 = vmatmul.f32.gmra.mxu0 %v159
    %v223 = vpop.f32.mrf.mxu0
    %v224 = vadd.f32 %v90, %v223
    %225 = vmatmul.f32.gmra.mxu0 %v162
    %v226 = vpop.f32.mrf.mxu0
    %v227 = vadd.f32 %v95, %v226
    %228 = vmatmul.f32.gmra.mxu0 %v165
    %v229 = vpop.f32.mrf.mxu0
    %v230 = vadd.f32 %v100, %v229
    %231 = vmatmul.f32.gmra.mxu0 %v168
    %v232 = vpop.f32.mrf.mxu0
    %v233 = vadd.f32 %v105, %v232
    %234 = vmatmul.f32.gmra.mxu0 %v171
    %v235 = vpop.f32.mrf.mxu0
    %v236 = vadd.f32 %v110, %v235
    %237 = vmatmul.f32.gmra.mxu0 %v174
    %v238 = vpop.f32.mrf.mxu0
    %v239 = vadd.f32 %v115, %v238
    %240 = vmatmul.f32.gmra.mxu0 %v177
    %v241 = vpop.f32.mrf.mxu0
    %v242 = vadd.f32 %v120, %v241
    %243 = vmatmul.f32.gmra.mxu0 %v180
    %v244 = vpop.f32.mrf.mxu0
    %v245 = vadd.f32 %v125, %v244
    %246 = vmatmul.f32.gmra.mxu0 %v183
    %v247 = vpop.f32.mrf.mxu0
    %v248 = vadd.f32 %v130, %v247
    %249 = vmatmul.f32.gmra.mxu0 %v186
    %v250 = vpop.f32.mrf.mxu0
    %v251 = vadd.f32 %v135, %v250
    %252 = vmatmul.f32.gmra.mxu0 %v189
    %v253 = vpop.f32.mrf.mxu0
    %v254 = vadd.f32 %v140, %v253
    %255 = vdwg.mxu0
    %256 = vmatpush.msra.mxu0 0.0
    %257 = vmatpush.msra.mxu0 0.0
    %258 = vmatpush.msra.mxu0 0.0
    %259 = vmatpush.msra.mxu0 0.0
    %260 = vmatpush.msra.mxu0 0.0
    %261 = vmatpush.msra.mxu0 0.0
    %262 = vmatpush.msra.mxu0 0.0
    %263 = vmatpush.msra.mxu0 0.0
    %264 = vmatpush.msra.mxu0 0.0
    %265 = vmatpush.msra.mxu0 0.0
    %266 = vmatpush.msra.mxu0 0.0
    %267 = vmatpush.msra.mxu0 0.0
    %268 = vmatpush.msra.mxu0 0.0
    %269 = vmatpush.msra.mxu0 0.0
    %270 = vmatpush.msra.mxu0 0.0
    %271 = vmatpush.msra.mxu0 %v29
    %272 = vmatmul.f32.gmra.mxu0 %v144
    %v273 = vpop.f32.mrf.mxu0
    %v274 = vadd.f32 %v65, %v273
    %275 = vmatmul.f32.gmra.mxu0 %v147
    %v276 = vpop.f32.mrf.mxu0
    %v277 = vadd.f32 %v70, %v276
    %278 = vmatmul.f32.gmra.mxu0 %v150
    %v279 = vpop.f32.mrf.mxu0
    %v280 = vadd.f32 %v75, %v279
    %281 = vmatmul.f32.gmra.mxu0 %v153
    %v282 = vpop.f32.mrf.mxu0
    %v283 = vadd.f32 %v80, %v282
    %284 = vmatmul.f32.gmra.mxu0 %v156
    %v285 = vpop.f32.mrf.mxu0
    %v286 = vadd.f32 %v85, %v285
    %287 = vmatmul.f32.gmra.mxu0 %v159
    %v288 = vpop.f32.mrf.mxu0
    %v289 = vadd.f32 %v90, %v288
    %290 = vmatmul.f32.gmra.mxu0 %v162
    %v291 = vpop.f32.mrf.mxu0
    %v292 = vadd.f32 %v95, %v291
    %293 = vmatmul.f32.gmra.mxu0 %v165
    %v294 = vpop.f32.mrf.mxu0
    %v295 = vadd.f32 %v100, %v294
    %296 = vmatmul.f32.gmra.mxu0 %v168
    %v297 = vpop.f32.mrf.mxu0
    %v298 = vadd.f32 %v105, %v297
    %299 = vmatmul.f32.gmra.mxu0 %v171
    %v300 = vpop.f32.mrf.mxu0
    %v301 = vadd.f32 %v110, %v300
    %302 = vmatmul.f32.gmra.mxu0 %v174
    %v303 = vpop.f32.mrf.mxu0
    %v304 = vadd.f32 %v115, %v303
    %305 = vmatmul.f32.gmra.mxu0 %v177
    %v306 = vpop.f32.mrf.mxu0
    %v307 = vadd.f32 %v120, %v306
    %308 = vmatmul.f32.gmra.mxu0 %v180
    %v309 = vpop.f32.mrf.mxu0
    %v310 = vadd.f32 %v125, %v309
    %311 = vmatmul.f32.gmra.mxu0 %v183
    %v312 = vpop.f32.mrf.mxu0
    %v313 = vadd.f32 %v130, %v312
    %314 = vmatmul.f32.gmra.mxu0 %v186
    %v315 = vpop.f32.mrf.mxu0
    %v316 = vadd.f32 %v135, %v315
    %317 = vmatmul.f32.gmra.mxu0 %v189
    %v318 = vpop.f32.mrf.mxu0
    %v319 = vadd.f32 %v140, %v318
    %320 = vdwg.mxu0
    %v321 = vmax.f32 %v209, 0.0
    %v322 = vmax.f32 %v274, 0.0
    %v323 = vmax.f32 %v212, 0.0
    %v324 = vmax.f32 %v277, 0.0
    %v325 = vmax.f32 %v215, 0.0
    %v326 = vmax.f32 %v280, 0.0
    %v327 = vmax.f32 %v218, 0.0
    %v328 = vmax.f32 %v283, 0.0
    %v329 = vmax.f32 %v221, 0.0
    %v330 = vmax.f32 %v286, 0.0
    %v331 = vmax.f32 %v224, 0.0
    %v332 = vmax.f32 %v289, 0.0
    %v333 = vmax.f32 %v227, 0.0
    %v334 = vmax.f32 %v292, 0.0
    %v335 = vmax.f32 %v230, 0.0
    %v336 = vmax.f32 %v295, 0.0
    %v337 = vmax.f32 %v233, 0.0
    %v338 = vmax.f32 %v298, 0.0
    %v339 = vmax.f32 %v236, 0.0
    %v340 = vmax.f32 %v301, 0.0
    %v341 = vmax.f32 %v239, 0.0
    %v342 = vmax.f32 %v304, 0.0
    %v343 = vmax.f32 %v242, 0.0
    %v344 = vmax.f32 %v307, 0.0
    %v345 = vmax.f32 %v245, 0.0
    %v346 = vmax.f32 %v310, 0.0
    %v347 = vmax.f32 %v248, 0.0
    %v348 = vmax.f32 %v313, 0.0
    %v349 = vmax.f32 %v251, 0.0
    %v350 = vmax.f32 %v316, 0.0
    %v351 = vmax.f32 %v254, 0.0
    %v352 = vmax.f32 %v319, 0.0
    %v353 = vld [vmem:[%s3] sm:$0xff]
    %v354 = vld [vmem:[%s3 + $0x8] sm:$0xff]
    %v355 = vld [vmem:[%s3 + $0x10] sm:$0xff]
    %v356 = vld [vmem:[%s3 + $0x18] sm:$0xff]
    %v357 = vld [vmem:[%s3 + $0x20] sm:$0xff]
    %v358 = vld [vmem:[%s3 + $0x28] sm:$0xff]
    %v359 = vld [vmem:[%s3 + $0x30] sm:$0xff]
    %v360 = vld [vmem:[%s3 + $0x38] sm:$0xff]
    %v361 = vld [vmem:[%s3 + $0x40] sm:$0xff]
    %v362 = vld [vmem:[%s3 + $0x48] sm:$0xff]
    %v363 = vld [vmem:[%s3 + $0x50] sm:$0xff]
    %v364 = vld [vmem:[%s3 + $0x58] sm:$0xff]
    %v365 = vld [vmem:[%s3 + $0x60] sm:$0xff]
    %v366 = vld [vmem:[%s3 + $0x68] sm:$0xff]
    %v367 = vld [vmem:[%s3 + $0x70] sm:$0xff]
    %v368 = vld [vmem:[%s3 + $0x78] sm:$0xff]
    %v369 = vld [vmem:[%s4] sm:$0xff]
    %v370 = vld [vmem:[%s4 + $0x8] sm:$0xff]
    %v371 = vld [vmem:[%s4 + $0x10] sm:$0xff]
    %v372 = vld [vmem:[%s4 + $0x18] sm:$0xff]
    %v373 = vld [vmem:[%s4 + $0x20] sm:$0xff]
    %v374 = vld [vmem:[%s4 + $0x28] sm:$0xff]
    %v375 = vld [vmem:[%s4 + $0x30] sm:$0xff]
    %v376 = vld [vmem:[%s4 + $0x38] sm:$0xff]
    %v377 = vld [vmem:[%s4 + $0x40] sm:$0xff]
    %v378 = vld [vmem:[%s4 + $0x48] sm:$0xff]
    %v379 = vld [vmem:[%s4 + $0x50] sm:$0xff]
    %v380 = vld [vmem:[%s4 + $0x58] sm:$0xff]
    %v381 = vld [vmem:[%s4 + $0x60] sm:$0xff]
    %v382 = vld [vmem:[%s4 + $0x68] sm:$0xff]
    %v383 = vld [vmem:[%s4 + $0x70] sm:$0xff]
    %v384 = vld [vmem:[%s4 + $0x78] sm:$0xff]
    %386 = vset.pattern.permute.xlu0 0
    %387 = vperm.xlu0 %386, %v369
    %v388 = vpop.permute.xlu0 %387
    %391 = vset.pattern.permute.xlu0 0
    %392 = vperm.xlu0 %391, %v370
    %v393 = vpop.permute.xlu0 %392
    %396 = vset.pattern.permute.xlu0 0
    %397 = vperm.xlu0 %396, %v371
    %v398 = vpop.permute.xlu0 %397
    %401 = vset.pattern.permute.xlu0 0
    %402 = vperm.xlu0 %401, %v372
    %v403 = vpop.permute.xlu0 %402
    %406 = vset.pattern.permute.xlu0 0
    %407 = vperm.xlu0 %406, %v373
    %v408 = vpop.permute.xlu0 %407
    %411 = vset.pattern.permute.xlu0 0
    %412 = vperm.xlu0 %411, %v374
    %v413 = vpop.permute.xlu0 %412
    %416 = vset.pattern.permute.xlu0 0
    %417 = vperm.xlu0 %416, %v375
    %v418 = vpop.permute.xlu0 %417
    %421 = vset.pattern.permute.xlu0 0
    %422 = vperm.xlu0 %421, %v376
    %v423 = vpop.permute.xlu0 %422
    %426 = vset.pattern.permute.xlu0 0
    %427 = vperm.xlu0 %426, %v377
    %v428 = vpop.permute.xlu0 %427
    %431 = vset.pattern.permute.xlu0 0
    %432 = vperm.xlu0 %431, %v378
    %v433 = vpop.permute.xlu0 %432
    %436 = vset.pattern.permute.xlu0 0
    %437 = vperm.xlu0 %436, %v379
    %v438 = vpop.permute.xlu0 %437
    %441 = vset.pattern.permute.xlu0 0
    %442 = vperm.xlu0 %441, %v380
    %v443 = vpop.permute.xlu0 %442
    %446 = vset.pattern.permute.xlu0 0
    %447 = vperm.xlu0 %446, %v381
    %v448 = vpop.permute.xlu0 %447
    %451 = vset.pattern.permute.xlu0 0
    %452 = vperm.xlu0 %451, %v382
    %v453 = vpop.permute.xlu0 %452
    %456 = vset.pattern.permute.xlu0 0
    %457 = vperm.xlu0 %456, %v383
    %v458 = vpop.permute.xlu0 %457
    %461 = vset.pattern.permute.xlu0 0
    %462 = vperm.xlu0 %461, %v384
    %v463 = vpop.permute.xlu0 %462
    %465 = vmatpush.msra.mxu0 %v351
    %466 = vmatpush.msra.mxu0 %v349
    %467 = vmatpush.msra.mxu0 %v347
    %468 = vmatpush.msra.mxu0 %v345
    %469 = vmatpush.msra.mxu0 %v343
    %470 = vmatpush.msra.mxu0 %v341
    %471 = vmatpush.msra.mxu0 %v339
    %472 = vmatpush.msra.mxu0 %v337
    %473 = vmatpush.msra.mxu0 %v335
    %474 = vmatpush.msra.mxu0 %v333
    %475 = vmatpush.msra.mxu0 %v331
    %476 = vmatpush.msra.mxu0 %v329
    %477 = vmatpush.msra.mxu0 %v327
    %478 = vmatpush.msra.mxu0 %v325
    %479 = vmatpush.msra.mxu0 %v323
    %480 = vmatpush.msra.mxu0 %v321
    %481 = vmatmul.f32.gmra.mxu0 %v353
    %v482 = vpop.f32.mrf.mxu0
    %v483 = vadd.f32 %v388, %v482
    %484 = vmatmul.f32.gmra.mxu0 %v354
    %v485 = vpop.f32.mrf.mxu0
    %v486 = vadd.f32 %v393, %v485
    %487 = vmatmul.f32.gmra.mxu0 %v355
    %v488 = vpop.f32.mrf.mxu0
    %v489 = vadd.f32 %v398, %v488
    %490 = vmatmul.f32.gmra.mxu0 %v356
    %v491 = vpop.f32.mrf.mxu0
    %v492 = vadd.f32 %v403, %v491
    %493 = vmatmul.f32.gmra.mxu0 %v357
    %v494 = vpop.f32.mrf.mxu0
    %v495 = vadd.f32 %v408, %v494
    %496 = vmatmul.f32.gmra.mxu0 %v358
    %v497 = vpop.f32.mrf.mxu0
    %v498 = vadd.f32 %v413, %v497
    %499 = vmatmul.f32.gmra.mxu0 %v359
    %v500 = vpop.f32.mrf.mxu0
    %v501 = vadd.f32 %v418, %v500
    %502 = vmatmul.f32.gmra.mxu0 %v360
    %v503 = vpop.f32.mrf.mxu0
    %v504 = vadd.f32 %v423, %v503
    %505 = vmatmul.f32.gmra.mxu0 %v361
    %v506 = vpop.f32.mrf.mxu0
    %v507 = vadd.f32 %v428, %v506
    %508 = vmatmul.f32.gmra.mxu0 %v362
    %v509 = vpop.f32.mrf.mxu0
    %v510 = vadd.f32 %v433, %v509
    %511 = vmatmul.f32.gmra.mxu0 %v363
    %v512 = vpop.f32.mrf.mxu0
    %v513 = vadd.f32 %v438, %v512
    %514 = vmatmul.f32.gmra.mxu0 %v364
    %v515 = vpop.f32.mrf.mxu0
    %v516 = vadd.f32 %v443, %v515
    %517 = vmatmul.f32.gmra.mxu0 %v365
    %v518 = vpop.f32.mrf.mxu0
    %v519 = vadd.f32 %v448, %v518
    %520 = vmatmul.f32.gmra.mxu0 %v366
    %v521 = vpop.f32.mrf.mxu0
    %v522 = vadd.f32 %v453, %v521
    %523 = vmatmul.f32.gmra.mxu0 %v367
    %v524 = vpop.f32.mrf.mxu0
    %v525 = vadd.f32 %v458, %v524
    %526 = vmatmul.f32.gmra.mxu0 %v368
    %v527 = vpop.f32.mrf.mxu0
    %v528 = vadd.f32 %v463, %v527
    %529 = vdwg.mxu0
    %530 = vmatpush.msra.mxu0 %v352
    %531 = vmatpush.msra.mxu0 %v350
    %532 = vmatpush.msra.mxu0 %v348
    %533 = vmatpush.msra.mxu0 %v346
    %534 = vmatpush.msra.mxu0 %v344
    %535 = vmatpush.msra.mxu0 %v342
    %536 = vmatpush.msra.mxu0 %v340
    %537 = vmatpush.msra.mxu0 %v338
    %538 = vmatpush.msra.mxu0 %v336
    %539 = vmatpush.msra.mxu0 %v334
    %540 = vmatpush.msra.mxu0 %v332
    %541 = vmatpush.msra.mxu0 %v330
    %542 = vmatpush.msra.mxu0 %v328
    %543 = vmatpush.msra.mxu0 %v326
    %544 = vmatpush.msra.mxu0 %v324
    %545 = vmatpush.msra.mxu0 %v322
    %546 = vmatmul.f32.gmra.mxu0 %v353
    %v547 = vpop.f32.mrf.mxu0
    %v548 = vadd.f32 %v388, %v547
    %549 = vmatmul.f32.gmra.mxu0 %v354
    %v550 = vpop.f32.mrf.mxu0
    %v551 = vadd.f32 %v393, %v550
    %552 = vmatmul.f32.gmra.mxu0 %v355
    %v553 = vpop.f32.mrf.mxu0
    %v554 = vadd.f32 %v398, %v553
    %555 = vmatmul.f32.gmra.mxu0 %v356
    %v556 = vpop.f32.mrf.mxu0
    %v557 = vadd.f32 %v403, %v556
    %558 = vmatmul.f32.gmra.mxu0 %v357
    %v559 = vpop.f32.mrf.mxu0
    %v560 = vadd.f32 %v408, %v559
    %561 = vmatmul.f32.gmra.mxu0 %v358
    %v562 = vpop.f32.mrf.mxu0
    %v563 = vadd.f32 %v413, %v562
    %564 = vmatmul.f32.gmra.mxu0 %v359
    %v565 = vpop.f32.mrf.mxu0
    %v566 = vadd.f32 %v418, %v565
    %567 = vmatmul.f32.gmra.mxu0 %v360
    %v568 = vpop.f32.mrf.mxu0
    %v569 = vadd.f32 %v423, %v568
    %570 = vmatmul.f32.gmra.mxu0 %v361
    %v571 = vpop.f32.mrf.mxu0
    %v572 = vadd.f32 %v428, %v571
    %573 = vmatmul.f32.gmra.mxu0 %v362
    %v574 = vpop.f32.mrf.mxu0
    %v575 = vadd.f32 %v433, %v574
    %576 = vmatmul.f32.gmra.mxu0 %v363
    %v577 = vpop.f32.mrf.mxu0
    %v578 = vadd.f32 %v438, %v577
    %579 = vmatmul.f32.gmra.mxu0 %v364
    %v580 = vpop.f32.mrf.mxu0
    %v581 = vadd.f32 %v443, %v580
    %582 = vmatmul.f32.gmra.mxu0 %v365
    %v583 = vpop.f32.mrf.mxu0
    %v584 = vadd.f32 %v448, %v583
    %585 = vmatmul.f32.gmra.mxu0 %v366
    %v586 = vpop.f32.mrf.mxu0
    %v587 = vadd.f32 %v453, %v586
    %588 = vmatmul.f32.gmra.mxu0 %v367
    %v589 = vpop.f32.mrf.mxu0
    %v590 = vadd.f32 %v458, %v589
    %591 = vmatmul.f32.gmra.mxu0 %v368
    %v592 = vpop.f32.mrf.mxu0
    %v593 = vadd.f32 %v463, %v592
    %594 = vdwg.mxu0
    %v595 = vmax.f32 %v483, 0.0
    %v596 = vmax.f32 %v548, 0.0
    %v597 = vmax.f32 %v486, 0.0
    %v598 = vmax.f32 %v551, 0.0
    %v599 = vmax.f32 %v489, 0.0
    %v600 = vmax.f32 %v554, 0.0
    %v601 = vmax.f32 %v492, 0.0
    %v602 = vmax.f32 %v557, 0.0
    %v603 = vmax.f32 %v495, 0.0
    %v604 = vmax.f32 %v560, 0.0
    %v605 = vmax.f32 %v498, 0.0
    %v606 = vmax.f32 %v563, 0.0
    %v607 = vmax.f32 %v501, 0.0
    %v608 = vmax.f32 %v566, 0.0
    %v609 = vmax.f32 %v504, 0.0
    %v610 = vmax.f32 %v569, 0.0
    %v611 = vmax.f32 %v507, 0.0
    %v612 = vmax.f32 %v572, 0.0
    %v613 = vmax.f32 %v510, 0.0
    %v614 = vmax.f32 %v575, 0.0
    %v615 = vmax.f32 %v513, 0.0
    %v616 = vmax.f32 %v578, 0.0
    %v617 = vmax.f32 %v516, 0.0
    %v618 = vmax.f32 %v581, 0.0
    %v619 = vmax.f32 %v519, 0.0
    %v620 = vmax.f32 %v584, 0.0
    %v621 = vmax.f32 %v522, 0.0
    %v622 = vmax.f32 %v587, 0.0
    %v623 = vmax.f32 %v525, 0.0
    %v624 = vmax.f32 %v590, 0.0
    %v625 = vmax.f32 %v528, 0.0
    %v626 = vmax.f32 %v593, 0.0
    %v627 = vld [vmem:[%s5] sm:$0x1]
    %s628 = sld [smem:[#allocation2]]
    %v629 = vstv %s628
    %630 = vmatpush.msra.mxu0 %v625
    %631 = vmatpush.msra.mxu0 %v623
    %632 = vmatpush.msra.mxu0 %v621
    %633 = vmatpush.msra.mxu0 %v619
    %634 = vmatpush.msra.mxu0 %v617
    %635 = vmatpush.msra.mxu0 %v615
    %636 = vmatpush.msra.mxu0 %v613
    %637 = vmatpush.msra.mxu0 %v611
    %638 = vmatpush.msra.mxu0 %v609
    %639 = vmatpush.msra.mxu0 %v607
    %640 = vmatpush.msra.mxu0 %v605
    %641 = vmatpush.msra.mxu0 %v603
    %642 = vmatpush.msra.mxu0 %v601
    %643 = vmatpush.msra.mxu0 %v599
    %644 = vmatpush.msra.mxu0 %v597
    %645 = vmatpush.msra.mxu0 %v595
    %646 = vmatmul.f32.gmra.mxu0 %v627
    %v647 = vpop.f32.mrf.mxu0
    %v648 = vadd.f32 %v629, %v647
    %649 = vdwg.mxu0
    %650 = vmatpush.msra.mxu0 %v626
    %651 = vmatpush.msra.mxu0 %v624
    %652 = vmatpush.msra.mxu0 %v622
    %653 = vmatpush.msra.mxu0 %v620
    %654 = vmatpush.msra.mxu0 %v618
    %655 = vmatpush.msra.mxu0 %v616
    %656 = vmatpush.msra.mxu0 %v614
    %657 = vmatpush.msra.mxu0 %v612
    %658 = vmatpush.msra.mxu0 %v610
    %659 = vmatpush.msra.mxu0 %v608
    %660 = vmatpush.msra.mxu0 %v606
    %661 = vmatpush.msra.mxu0 %v604
    %662 = vmatpush.msra.mxu0 %v602
    %663 = vmatpush.msra.mxu0 %v600
    %664 = vmatpush.msra.mxu0 %v598
    %665 = vmatpush.msra.mxu0 %v596
    %666 = vmatmul.f32.gmra.mxu0 %v627
    %v667 = vpop.f32.mrf.mxu0
    %v668 = vadd.f32 %v629, %v667
    %669 = vdwg.mxu0
    %v670 = vmax.f32 %v648, -1.0
    %v671 = vmax.f32 %v668, -1.0
    %v672 = vmin.f32 %v670, 1.0
    %v673 = vmin.f32 %v671, 1.0
    %v676 = vrot.slane %v673, 7
    %vm677 = vcmask 1040384
    %v678 = vsel %vm677, %v672, %v676
    %v680 = vlaneseq
    %vm681 = vcmp.ge.s32.totalorder %v680, 0
    %vm682 = vcmp.lt.s32.totalorder %v680, 256
    %vm683 = vmand %vm681, %vm682
    %684 = vst.msk [vmem:[#allocation3] sm:$0x3] %vm683, %v678
    // Predicated region
    $region30: #{deterministic_policy_forward.1} parent=1 // pred_check
      _
    $region31: #{deterministic_policy_forward.1} parent=1 // pred_check_branch
      %686 = sbr.rel (0) target = $region33
    $region32: #{deterministic_policy_forward.1} parent=1 // pred_region
      %688 = vsyncadd [#allocation4], 0
      %s690 = sshll.u32 [#allocation3], 4
      %s691 = int_to_ptr.vmem [resolvable:$true] %s690
      %s692 = sshll.u32 %s7, 4
      %s693 = int_to_ptr.hbm [resolvable:$true] %s692
      %695 = dma.vmem_to_hbm [thread:$0]  %s691, 32, %s693, [#allocation4]
    $region33: #{deterministic_policy_forward.1} parent=1 // pred_fallthru
      _
    // Predicated region
    $region34: #{deterministic_policy_forward.1} parent=1 // pred_check
      _
    $region35: #{deterministic_policy_forward.1} parent=1 // pred_check_branch
      %697 = sbr.rel (0) target = $region37
    $region36: #{deterministic_policy_forward.1} parent=1 // pred_region
      %699 = dma.done [#allocation4], 32
    $region37: #{deterministic_policy_forward.1} parent=1 // pred_fallthru
      _
    %700 = vsyncpa [#allocation4], 1

</llo_original>
